<compile_context>
chip_gen: v5e
topology: v5e:2x2
jax: 0.10.0
libtpu: 0.0.40
codegen_flags: <defaults>
</compile_context>

<pallas_src>
import functools

import jax
import jax.numpy as jnp
from jax.experimental import pallas as pl
from jax.experimental.pallas import tpu as pltpu

INPUT_SIZE = 3072      # 3 * 32 * 32
HIDDEN_SIZE = 128
NUM_CLASSES = 10
OUT_PAD = 128          # lane-dense padded output width (multiple of 128)


def _round_up(n, m):
    return (n + m - 1) // m * m


def _chip_defaults():
    """Generation-aware (max_tile_b, vmem_limit_bytes).

    128-MiB-VMEM chips (v5e / v6e): big tiles + raised scoped limit.
    64-MiB-VMEM chips (v7x per-TC) or unknown: capped tile + 48 MiB limit.
    """
    try:
        vmem_bytes = int(pltpu.get_tpu_info().vmem_capacity_bytes)
    except Exception:
        vmem_bytes = 64 * 1024 * 1024  # conservative fallback
    if vmem_bytes >= 128 * 1024 * 1024:
        return 2048, 64 * 1024 * 1024
    return 1024, 48 * 1024 * 1024


def _mlp_kernel(x_ref, w1_ref, b1_ref, w2_ref, b2_ref, o_ref, *, cast_bf16):
    x = x_ref[...]
    w1 = w1_ref[...]
    if cast_bf16:
        # In-VMEM cast only (no extra HBM traffic); f32 accumulation on MXU.
        x = x.astype(jnp.bfloat16)
        w1 = w1.astype(jnp.bfloat16)
    # fc1: [tb, 3072] @ [3072, 128] + [1, 128]
    h = jnp.dot(x, w1, preferred_element_type=jnp.float32)
    h = jnp.maximum(h + b1_ref[...], 0.0)                      # ReLU
    # fc2: [tb, 128] @ [128, 128] + [1, 128] (padded to 128 lanes -> dense vst)
    out = jnp.dot(h, w2_ref[...], preferred_element_type=jnp.float32)
    o_ref[...] = (out + b2_ref[...]).astype(o_ref.dtype)


def simple_nn_forward(x, w1, b1, w2, b2, *, tile_b=None, mxu_bf16=False):
    """Forward pass of SimpleNN.

    x: [B, 3, 32, 32] (or anything flattening to [-1, 3072]).
    tile_b: max rows per grid step; defaults to a generation-aware value.
    mxu_bf16: cast the fc1 operands to bf16 *inside* the kernel (f32 in HBM,
      f32 accumulation).  Recommended on v5e; loosens numerics to ~1e-2.
    """
    x_flat = x.reshape(-1, INPUT_SIZE)
    batch = x_flat.shape[0]

    chip_tb, vmem_limit = _chip_defaults()
    if tile_b is None:
        tile_b = chip_tb

    # Sublane alignment (16 rows if the activations are already bf16 so packed
    # vregs are full; otherwise 8).  Only odd batches ever get padded, and only
    # by < row_align rows -- never up to a full tile.
    row_align = 16 if x_flat.dtype == jnp.bfloat16 else 8
    batch_a = _round_up(batch, row_align)
    if batch_a != batch:
        x_flat = jnp.pad(x_flat, ((0, batch_a - batch), (0, 0)))

    # Batch tile: at most tile_b, at least row_align, and split so the grid
    # has >= 2 steps when possible (keeps both v7x TensorCores busy).
    tb = min(tile_b, max(row_align, _round_up(pl.cdiv(batch_a, 2), row_align)))
    tb = min(tb, batch_a)
    grid = (pl.cdiv(batch_a, tb),)   # ragged last block handled by masking

    # Zero-pad fc2 to a 128-wide (lane-dense) output; extra columns are zeros.
    w2p = jnp.zeros((HIDDEN_SIZE, OUT_PAD), w2.dtype).at[:, :NUM_CLASSES].set(w2)
    b2p = jnp.zeros((1, OUT_PAD), b2.dtype).at[0, :NUM_CLASSES].set(b2)
    b1r = b1.reshape(1, HIDDEN_SIZE)

    cost = pl.CostEstimate(
        flops=2 * batch_a * INPUT_SIZE * HIDDEN_SIZE
        + 2 * batch_a * HIDDEN_SIZE * OUT_PAD,
        transcendentals=0,
        bytes_accessed=x_flat.size * x_flat.dtype.itemsize
        + w1.size * w1.dtype.itemsize
        + w2p.size * w2p.dtype.itemsize
        + b1r.size * b1r.dtype.itemsize
        + b2p.size * b2p.dtype.itemsize
        + batch_a * OUT_PAD * 4,
    )

    kernel = functools.partial(_mlp_kernel, cast_bf16=bool(mxu_bf16))

    out_padded = pl.pallas_call(
        kernel,
        out_shape=jax.ShapeDtypeStruct((batch_a, OUT_PAD), jnp.float32),
        grid=grid,
        in_specs=[
            pl.BlockSpec((tb, INPUT_SIZE), lambda i: (i, 0)),           # x tile (pipelined)
            pl.BlockSpec((INPUT_SIZE, HIDDEN_SIZE), lambda i: (0, 0)),  # w1 (VMEM-resident)
            pl.BlockSpec((1, HIDDEN_SIZE), lambda i: (0, 0)),           # b1
            pl.BlockSpec((HIDDEN_SIZE, OUT_PAD), lambda i: (0, 0)),     # w2 (padded)
            pl.BlockSpec((1, OUT_PAD), lambda i: (0, 0)),               # b2 (padded)
        ],
        out_specs=pl.BlockSpec((tb, OUT_PAD), lambda i: (i, 0)),
        compiler_params=pltpu.CompilerParams(
            dimension_semantics=("parallel",),   # batch tiles shard across v7x's 2 TCs
            vmem_limit_bytes=vmem_limit,
        ),
        cost_estimate=cost,
    )(x_flat, w1, b1r, w2p, b2p)

    # Drop alignment rows and the zero-padded output lanes.
    return out_padded[:batch, :NUM_CLASSES]


def init_params(key):
    """Deterministic init mimicking nn.Linear's uniform(-1/sqrt(fan_in), ...)."""
    k1, k2, k3, k4 = jax.random.split(key, 4)
    bound1 = 1.0 / (INPUT_SIZE ** 0.5)
    bound2 = 1.0 / (HIDDEN_SIZE ** 0.5)
    # stored as [in, out] (transposed vs. torch's [out, in])
    w1 = jax.random.uniform(k1, (INPUT_SIZE, HIDDEN_SIZE), jnp.float32, -bound1, bound1)
    b1 = jax.random.uniform(k2, (HIDDEN_SIZE,), jnp.float32, -bound1, bound1)
    w2 = jax.random.uniform(k3, (HIDDEN_SIZE, NUM_CLASSES), jnp.float32, -bound2, bound2)
    b2 = jax.random.uniform(k4, (NUM_CLASSES,), jnp.float32, -bound2, bound2)
    return w1, b1, w2, b2


def _reference(x, w1, b1, w2, b2):
    x_flat = x.reshape(-1, INPUT_SIZE)
    return jnp.maximum(x_flat @ w1 + b1, 0.0) @ w2 + b2


if __name__ == "__main__":
    key = jax.random.PRNGKey(0)
    k_x, k_x2, k_p = jax.random.split(key, 3)
    w1, b1, w2, b2 = init_params(k_p)

    # Small deterministic input, default f32 path (matches torch fp32 semantics).
    batch = 2
    x = jax.random.normal(k_x, (batch, 3, 32, 32), jnp.float32)
    out = jax.block_until_ready(simple_nn_forward(x, w1, b1, w2, b2))
    ref = _reference(x, w1, b1, w2, b2)
    assert out.shape == (batch, NUM_CLASSES)
    assert jnp.allclose(out, ref, atol=1e-4, rtol=1e-4)

    # Multi-step grid + ragged last block (24 rows, 16-row tiles -> masked tail).
    batch2 = 24
    x2 = jax.random.normal(k_x2, (batch2, 3, 32, 32), jnp.float32)
    out2 = jax.block_until_ready(simple_nn_forward(x2, w1, b1, w2, b2, tile_b=16))
    ref2 = _reference(x2, w1, b1, w2, b2)
    assert out2.shape == (batch2, NUM_CLASSES)
    assert jnp.allclose(out2, ref2, atol=1e-4, rtol=1e-4)

    # In-kernel bf16 MXU path (v5e-oriented): f32 in HBM, looser tolerance enforced.
    out3 = jax.block_until_ready(
        simple_nn_forward(x2, w1, b1, w2, b2, tile_b=16, mxu_bf16=True))
    assert out3.shape == (batch2, NUM_CLASSES)
    assert jnp.allclose(out3, ref2, atol=5e-2, rtol=5e-2)

    print("KERNEL_OK")
</pallas_src>

<mosaic_0001>
module attributes {stable_mosaic.version = 11 : i64} {
  func.func @_mlp_kernel(%arg0: i32, %arg1: memref<8x3072xf32, #tpu.memory_space<vmem>>, %arg2: memref<3072x128xf32, #tpu.memory_space<vmem>>, %arg3: memref<1x128xf32, #tpu.memory_space<vmem>>, %arg4: memref<128x128xf32, #tpu.memory_space<vmem>>, %arg5: memref<1x128xf32, #tpu.memory_space<vmem>>, %arg6: memref<8x128xf32, #tpu.memory_space<vmem>>) attributes {dimension_semantics = [#tpu.dimension_semantics<parallel>], iteration_bounds = array<i64: 1>, scalar_prefetch = 0 : i64, scratch_operands = 0 : i64, tpu.core_type = #tpu.core_type<tc>, window_params = [{transform_indices = @transform_0, window_bounds = array<i64: 8, 3072>}, {pipeline_mode = #tpu.pipeline_mode<synchronous>, transform_indices = @transform_1, window_bounds = array<i64: 3072, 128>}, {pipeline_mode = #tpu.pipeline_mode<synchronous>, transform_indices = @transform_2, window_bounds = array<i64: 1, 128>}, {pipeline_mode = #tpu.pipeline_mode<synchronous>, transform_indices = @transform_3, window_bounds = array<i64: 128, 128>}, {pipeline_mode = #tpu.pipeline_mode<synchronous>, transform_indices = @transform_4, window_bounds = array<i64: 1, 128>}, {transform_indices = @transform_5, window_bounds = array<i64: 8, 128>}]} {
    %c0 = arith.constant 0 : index
    %c0_0 = arith.constant 0 : index
    %0 = vector.load %arg1[%c0, %c0_0] : memref<8x3072xf32, #tpu.memory_space<vmem>>, vector<8x3072xf32>
    %c0_1 = arith.constant 0 : index
    %c0_2 = arith.constant 0 : index
    %1 = vector.load %arg2[%c0_1, %c0_2] : memref<3072x128xf32, #tpu.memory_space<vmem>>, vector<3072x128xf32>
    %cst = arith.constant dense<0.000000e+00> : vector<8x128xf32>
    %2 = tpu.matmul %0, %1, %cst {dimension_numbers = #tpu.dot_dimension_numbers<[1], [0], [0], [1], [0, 0, 1, 1], [], []>} : vector<8x3072xf32>, vector<3072x128xf32>, vector<8x128xf32> -> vector<8x128xf32>
    %c0_3 = arith.constant 0 : index
    %c0_4 = arith.constant 0 : index
    %3 = vector.load %arg3[%c0_3, %c0_4] : memref<1x128xf32, #tpu.memory_space<vmem>>, vector<1x128xf32>
    %4 = vector.broadcast %3 : vector<1x128xf32> to vector<8x128xf32>
    %5 = arith.addf %2, %4 : vector<8x128xf32>
    %cst_5 = arith.constant 0.000000e+00 : f32
    %6 = vector.broadcast %cst_5 : f32 to vector<8x128xf32>
    %7 = arith.maximumf %5, %6 : vector<8x128xf32>
    %c0_6 = arith.constant 0 : index
    %c0_7 = arith.constant 0 : index
    %8 = vector.load %arg4[%c0_6, %c0_7] : memref<128x128xf32, #tpu.memory_space<vmem>>, vector<128x128xf32>
    %cst_8 = arith.constant dense<0.000000e+00> : vector<8x128xf32>
    %9 = tpu.matmul %7, %8, %cst_8 {dimension_numbers = #tpu.dot_dimension_numbers<[1], [0], [0], [1], [0, 0, 1, 1], [], []>} : vector<8x128xf32>, vector<128x128xf32>, vector<8x128xf32> -> vector<8x128xf32>
    %c0_9 = arith.constant 0 : index
    %c0_10 = arith.constant 0 : index
    %10 = vector.load %arg5[%c0_9, %c0_10] : memref<1x128xf32, #tpu.memory_space<vmem>>, vector<1x128xf32>
    %11 = vector.broadcast %10 : vector<1x128xf32> to vector<8x128xf32>
    %12 = arith.addf %9, %11 : vector<8x128xf32>
    %c0_11 = arith.constant 0 : index
    %c0_12 = arith.constant 0 : index
    %13 = vector.load %arg6[%c0_11, %c0_12] : memref<8x128xf32, #tpu.memory_space<vmem>>, vector<8x128xf32>
    tpu.vector_store %arg6[%c0_11, %c0_12], %12 {strides = array<i32>} : memref<8x128xf32, #tpu.memory_space<vmem>>, vector<8x128xf32>,
    return
  }
  func.func @transform_0(%arg0: i32) -> (i32, i32) {
    %c0_i32 = arith.constant 0 : i32
    %c0_i32_0 = arith.constant 0 : i32
    return %arg0, %c0_i32 : i32, i32
  }
  func.func @transform_1(%arg0: i32) -> (i32, i32) {
    %c0_i32 = arith.constant 0 : i32
    %c0_i32_0 = arith.constant 0 : i32
    %c0_i32_1 = arith.constant 0 : i32
    return %c0_i32, %c0_i32_0 : i32, i32
  }
  func.func @transform_2(%arg0: i32) -> (i32, i32) {
    %c0_i32 = arith.constant 0 : i32
    %c0_i32_0 = arith.constant 0 : i32
    %c0_i32_1 = arith.constant 0 : i32
    return %c0_i32, %c0_i32_0 : i32, i32
  }
  func.func @transform_3(%arg0: i32) -> (i32, i32) {
    %c0_i32 = arith.constant 0 : i32
    %c0_i32_0 = arith.constant 0 : i32
    %c0_i32_1 = arith.constant 0 : i32
    return %c0_i32, %c0_i32_0 : i32, i32
  }
  func.func @transform_4(%arg0: i32) -> (i32, i32) {
    %c0_i32 = arith.constant 0 : i32
    %c0_i32_0 = arith.constant 0 : i32
    %c0_i32_1 = arith.constant 0 : i32
    return %c0_i32, %c0_i32_0 : i32, i32
  }
  func.func @transform_5(%arg0: i32) -> (i32, i32) {
    %c0_i32 = arith.constant 0 : i32
    %c0_i32_0 = arith.constant 0 : i32
    return %arg0, %c0_i32 : i32, i32
  }
}

</mosaic_0001>

<llo_original>
// kernel: tpu_custom_call.1
$region0: #{tpu_custom_call.1}
  #allocation0 [shape = 'u32[]', space=smem, size = 0x4, offset = 0x4, fixed_abs, tag = 'smem constant byte address 0x4 - core index']
  #allocation1 [shape = 'u32[72,128]{1,0:T(1,128)}', space=vmem, size = 0x9000, scoped, tag = 'internal scratch']
  %s0 = inlined_call_operand.hbm [shape: f32[8,3072], index: 0, kind: input, shape index: {}]
  %s1 = inlined_call_operand.hbm [shape: f32[3072,128], index: 1, kind: input, shape index: {}]
  %s2 = inlined_call_operand.hbm [shape: f32[1,128], index: 2, kind: input, shape index: {}]
  %s3 = inlined_call_operand.hbm [shape: f32[128,128], index: 3, kind: input, shape index: {}]
  %s4 = inlined_call_operand.hbm [shape: f32[1,128], index: 4, kind: input, shape index: {}]
  %s5 = inlined_call_operand.hbm [shape: f32[8,128], index: 5, kind: output, shape index: {}]
  %s6 = sld [smem:[#allocation0]]
  $region50: #{tpu_custom_call.1} parent=0
    _
  %s8 = ssub.s32 1, %s6
  %s9 = scalar_select 0, %s8, %s6
  $region1: #{tpu_custom_call.1} parent=0
    #allocation2 [shape = 'u8[98304]{0}', space=vmem, size = 0x18000, scoped, tag = 'input window, operand 0, single buffered']
    #allocation3 [shape = 's32[1]{0}', space=sflag, size = 0x4, scoped, tag = 'scoped memory for tpu_custom_call.1']
    #allocation4 [shape = 's32[1]{0}', space=sflag, size = 0x4, scoped, tag = 'scoped memory for tpu_custom_call.1']
    #allocation5 [shape = 'u8[1572864]{0}', space=vmem, size = 0x180000, scoped, tag = 'input window, operand 1, single buffered']
    #allocation6 [shape = 's32[1]{0}', space=sflag, size = 0x4, scoped, tag = 'scoped memory for tpu_custom_call.1']
    #allocation7 [shape = 'u8[512]{0}', space=vmem, size = 0x400, scoped, tag = 'input window, operand 2, single buffered']
    #allocation8 [shape = 'u8[65536]{0}', space=vmem, size = 0x10000, scoped, tag = 'input window, operand 3, single buffered']
    #allocation9 [shape = 's32[1]{0}', space=sflag, size = 0x4, scoped, tag = 'scoped memory for tpu_custom_call.1']
    #allocation10 [shape = 'u8[512]{0}', space=vmem, size = 0x400, scoped, tag = 'input window, operand 4, single buffered']
    #allocation11 [shape = 'u8[4096]{0}', space=vmem, size = 0x1000, scoped, tag = 'output window, operand 0, single buffered']
    %10 = vsyncpa [#allocation3], 0
    %11 = vsyncpa [#allocation6], 0
    %12 = vsyncpa [#allocation9], 0
    %13 = vsyncpa [#allocation4], 0
    // Predicated region
    $region2: #{tpu_custom_call.1} parent=1 // pred_check
      _
    $region3: #{tpu_custom_call.1} parent=1 // pred_check_branch
      %15 = sbr.rel (0) target = $region5
    $region4: #{tpu_custom_call.1} parent=1 // pred_region
      %17 = vsyncadd [#allocation3], 0
      %s19 = sshll.u32 %s0, 4
      %s20 = int_to_ptr.hbm [resolvable:$true] %s19
      %s21 = sshll.u32 [#allocation2], 4
      %s22 = int_to_ptr.vmem [resolvable:$true] %s21
      %24 = dma.hbm_to_vmem [thread:$0]  %s20, 3072, %s22, [#allocation3]
    $region5: #{tpu_custom_call.1} parent=1 // pred_fallthru
      _
    // Predicated region
    $region6: #{tpu_custom_call.1} parent=1 // pred_check
      _
    $region7: #{tpu_custom_call.1} parent=1 // pred_check_branch
      %26 = sbr.rel (0) target = $region9
    $region8: #{tpu_custom_call.1} parent=1 // pred_region
      %28 = vsyncadd [#allocation6], 0
      %s29 = sshll.u32 %s1, 4
      %s30 = int_to_ptr.hbm [resolvable:$true] %s29
      %s31 = sshll.u32 [#allocation5], 4
      %s32 = int_to_ptr.vmem [resolvable:$true] %s31
      %37 = dma.hbm_to_vmem [thread:$0]  %s30, 49152, %s32, [#allocation6], 128, 128, 8
    $region9: #{tpu_custom_call.1} parent=1 // pred_fallthru
      _
    // Predicated region
    $region10: #{tpu_custom_call.1} parent=1 // pred_check
      _
    $region11: #{tpu_custom_call.1} parent=1 // pred_check_branch
      %39 = sbr.rel (0) target = $region13
    $region12: #{tpu_custom_call.1} parent=1 // pred_region
      %41 = vsyncadd [#allocation6], 0
      %s43 = sshll.u32 %s2, 4
      %s44 = int_to_ptr.hbm [resolvable:$true] %s43
      %s45 = sshll.u32 [#allocation7], 4
      %s46 = int_to_ptr.vmem [resolvable:$true] %s45
      %48 = dma.hbm_to_vmem [thread:$0]  %s44, 16, %s46, [#allocation6]
    $region13: #{tpu_custom_call.1} parent=1 // pred_fallthru
      _
    // Predicated region
    $region14: #{tpu_custom_call.1} parent=1 // pred_check
      _
    $region15: #{tpu_custom_call.1} parent=1 // pred_check_branch
      %50 = sbr.rel (0) target = $region17
    $region16: #{tpu_custom_call.1} parent=1 // pred_region
      %52 = vsyncadd [#allocation9], 0
      %s53 = sshll.u32 %s3, 4
      %s54 = int_to_ptr.hbm [resolvable:$true] %s53
      %s55 = sshll.u32 [#allocation8], 4
      %s56 = int_to_ptr.vmem [resolvable:$true] %s55
      %61 = dma.hbm_to_vmem [thread:$0]  %s54, 2048, %s56, [#allocation9], 128, 128, 8
    $region17: #{tpu_custom_call.1} parent=1 // pred_fallthru
      _
    // Predicated region
    $region18: #{tpu_custom_call.1} parent=1 // pred_check
      _
    $region19: #{tpu_custom_call.1} parent=1 // pred_check_branch
      %63 = sbr.rel (0) target = $region21
    $region20: #{tpu_custom_call.1} parent=1 // pred_region
      %65 = vsyncadd [#allocation9], 0
      %s67 = sshll.u32 %s4, 4
      %s68 = int_to_ptr.hbm [resolvable:$true] %s67
      %s69 = sshll.u32 [#allocation10], 4
      %s70 = int_to_ptr.vmem [resolvable:$true] %s69
      %72 = dma.hbm_to_vmem [thread:$0]  %s68, 16, %s70, [#allocation9]
    $region21: #{tpu_custom_call.1} parent=1 // pred_fallthru
      _
    // Predicated region
    $region22: #{tpu_custom_call.1} parent=1 // pred_check
      _
    $region23: #{tpu_custom_call.1} parent=1 // pred_check_branch
      %74 = sbr.rel (0) target = $region25
    $region24: #{tpu_custom_call.1} parent=1 // pred_region
      %76 = dma.done [#allocation3], 3072
    $region25: #{tpu_custom_call.1} parent=1 // pred_fallthru
      _
    // Predicated region
    $region26: #{tpu_custom_call.1} parent=1 // pred_check
      _
    $region27: #{tpu_custom_call.1} parent=1 // pred_check_branch
      %78 = sbr.rel (0) target = $region29
    $region28: #{tpu_custom_call.1} parent=1 // pred_region
      %80 = dma.done [#allocation6], 49152
    $region29: #{tpu_custom_call.1} parent=1 // pred_fallthru
      _
    // Predicated region
    $region30: #{tpu_custom_call.1} parent=1 // pred_check
      _
    $region31: #{tpu_custom_call.1} parent=1 // pred_check_branch
      %82 = sbr.rel (0) target = $region33
    $region32: #{tpu_custom_call.1} parent=1 // pred_region
      %84 = dma.done [#allocation6], 16
    $region33: #{tpu_custom_call.1} parent=1 // pred_fallthru
      _
    // Predicated region
    $region34: #{tpu_custom_call.1} parent=1 // pred_check
      _
    $region35: #{tpu_custom_call.1} parent=1 // pred_check_branch
      %86 = sbr.rel (0) target = $region37
    $region36: #{tpu_custom_call.1} parent=1 // pred_region
      %88 = dma.done [#allocation9], 2048
    $region37: #{tpu_custom_call.1} parent=1 // pred_fallthru
      _
    // Predicated region
    $region38: #{tpu_custom_call.1} parent=1 // pred_check
      _
    $region39: #{tpu_custom_call.1} parent=1 // pred_check_branch
      %90 = sbr.rel (0) target = $region41
    $region40: #{tpu_custom_call.1} parent=1 // pred_region
      %92 = dma.done [#allocation9], 16
    $region41: #{tpu_custom_call.1} parent=1 // pred_fallthru
      _
    %v93 = vld [vmem:[#allocation2] sm:$0xff]
    %v94 = vld [vmem:[#allocation2 + $0x8] sm:$0xff]
    %v95 = vld [vmem:[#allocation2 + $0x10] sm:$0xff]
    %v96 = vld [vmem:[#allocation2 + $0x18] sm:$0xff]
    %v97 = vld [vmem:[#allocation2 + $0x20] sm:$0xff]
    %v98 = vld [vmem:[#allocation2 + $0x28] sm:$0xff]
    %v99 = vld [vmem:[#allocation2 + $0x30] sm:$0xff]
    %v100 = vld [vmem:[#allocation2 + $0x38] sm:$0xff]
    %v101 = vld [vmem:[#allocation2 + $0x40] sm:$0xff]
    %v102 = vld [vmem:[#allocation2 + $0x48] sm:$0xff]
    %v103 = vld [vmem:[#allocation2 + $0x50] sm:$0xff]
    %v104 = vld [vmem:[#allocation2 + $0x58] sm:$0xff]
    %v105 = vld [vmem:[#allocation2 + $0x60] sm:$0xff]
    %v106 = vld [vmem:[#allocation2 + $0x68] sm:$0xff]
    %v107 = vld [vmem:[#allocation2 + $0x70] sm:$0xff]
    %v108 = vld [vmem:[#allocation2 + $0x78] sm:$0xff]
    %v109 = vld [vmem:[#allocation2 + $0x80] sm:$0xff]
    %v110 = vld [vmem:[#allocation2 + $0x88] sm:$0xff]
    %v111 = vld [vmem:[#allocation2 + $0x90] sm:$0xff]
    %v112 = vld [vmem:[#allocation2 + $0x98] sm:$0xff]
    %v113 = vld [vmem:[#allocation2 + $0xa0] sm:$0xff]
    %v114 = vld [vmem:[#allocation2 + $0xa8] sm:$0xff]
    %v115 = vld [vmem:[#allocation2 + $0xb0] sm:$0xff]
    %v116 = vld [vmem:[#allocation2 + $0xb8] sm:$0xff]
    %v117 = vld [vmem:[#allocation5] sm:$0xff]
    %v118 = vld [vmem:[#allocation5 + $0x8] sm:$0xff]
    %v119 = vld [vmem:[#allocation5 + $0x10] sm:$0xff]
    %v120 = vld [vmem:[#allocation5 + $0x18] sm:$0xff]
    %v121 = vld [vmem:[#allocation5 + $0x20] sm:$0xff]
    %v122 = vld [vmem:[#allocation5 + $0x28] sm:$0xff]
    %v123 = vld [vmem:[#allocation5 + $0x30] sm:$0xff]
    %v124 = vld [vmem:[#allocation5 + $0x38] sm:$0xff]
    %v125 = vld [vmem:[#allocation5 + $0x40] sm:$0xff]
    %v126 = vld [vmem:[#allocation5 + $0x48] sm:$0xff]
    %v127 = vld [vmem:[#allocation5 + $0x50] sm:$0xff]
    %v128 = vld [vmem:[#allocation5 + $0x58] sm:$0xff]
    %v129 = vld [vmem:[#allocation5 + $0x60] sm:$0xff]
    %v130 = vld [vmem:[#allocation5 + $0x68] sm:$0xff]
    %v131 = vld [vmem:[#allocation5 + $0x70] sm:$0xff]
    %v132 = vld [vmem:[#allocation5 + $0x78] sm:$0xff]
    %v133 = vld [vmem:[#allocation5 + $0x80] sm:$0xff]
    %v134 = vld [vmem:[#allocation5 + $0x88] sm:$0xff]
    %v135 = vld [vmem:[#allocation5 + $0x90] sm:$0xff]
    %v136 = vld [vmem:[#allocation5 + $0x98] sm:$0xff]
    %v137 = vld [vmem:[#allocation5 + $0xa0] sm:$0xff]
    %v138 = vld [vmem:[#allocation5 + $0xa8] sm:$0xff]
    %v139 = vld [vmem:[#allocation5 + $0xb0] sm:$0xff]
    %v140 = vld [vmem:[#allocation5 + $0xb8] sm:$0xff]
    %v141 = vld [vmem:[#allocation5 + $0xc0] sm:$0xff]
    %v142 = vld [vmem:[#allocation5 + $0xc8] sm:$0xff]
    %v143 = vld [vmem:[#allocation5 + $0xd0] sm:$0xff]
    %v144 = vld [vmem:[#allocation5 + $0xd8] sm:$0xff]
    %v145 = vld [vmem:[#allocation5 + $0xe0] sm:$0xff]
    %v146 = vld [vmem:[#allocation5 + $0xe8] sm:$0xff]
    %v147 = vld [vmem:[#allocation5 + $0xf0] sm:$0xff]
    %v148 = vld [vmem:[#allocation5 + $0xf8] sm:$0xff]
    %v149 = vld [vmem:[#allocation5 + $0x100] sm:$0xff]
    %v150 = vld [vmem:[#allocation5 + $0x108] sm:$0xff]
    %v151 = vld [vmem:[#allocation5 + $0x110] sm:$0xff]
    %v152 = vld [vmem:[#allocation5 + $0x118] sm:$0xff]
    %v153 = vld [vmem:[#allocation5 + $0x120] sm:$0xff]
    %v154 = vld [vmem:[#allocation5 + $0x128] sm:$0xff]
    %v155 = vld [vmem:[#allocation5 + $0x130] sm:$0xff]
    %v156 = vld [vmem:[#allocation5 + $0x138] sm:$0xff]
    %v157 = vld [vmem:[#allocation5 + $0x140] sm:$0xff]
    %v158 = vld [vmem:[#allocation5 + $0x148] sm:$0xff]
    %v159 = vld [vmem:[#allocation5 + $0x150] sm:$0xff]
    %v160 = vld [vmem:[#allocation5 + $0x158] sm:$0xff]
    %v161 = vld [vmem:[#allocation5 + $0x160] sm:$0xff]
    %v162 = vld [vmem:[#allocation5 + $0x168] sm:$0xff]
    %v163 = vld [vmem:[#allocation5 + $0x170] sm:$0xff]
    %v164 = vld [vmem:[#allocation5 + $0x178] sm:$0xff]
    %v165 = vld [vmem:[#allocation5 + $0x180] sm:$0xff]
    %v166 = vld [vmem:[#allocation5 + $0x188] sm:$0xff]
    %v167 = vld [vmem:[#allocation5 + $0x190] sm:$0xff]
    %v168 = vld [vmem:[#allocation5 + $0x198] sm:$0xff]
    %v169 = vld [vmem:[#allocation5 + $0x1a0] sm:$0xff]
    %v170 = vld [vmem:[#allocation5 + $0x1a8] sm:$0xff]
    %v171 = vld [vmem:[#allocation5 + $0x1b0] sm:$0xff]
    %v172 = vld [vmem:[#allocation5 + $0x1b8] sm:$0xff]
    %v173 = vld [vmem:[#allocation5 + $0x1c0] sm:$0xff]
    %v174 = vld [vmem:[#allocation5 + $0x1c8] sm:$0xff]
    %v175 = vld [vmem:[#allocation5 + $0x1d0] sm:$0xff]
    %v176 = vld [vmem:[#allocation5 + $0x1d8] sm:$0xff]
    %v177 = vld [vmem:[#allocation5 + $0x1e0] sm:$0xff]
    %v178 = vld [vmem:[#allocation5 + $0x1e8] sm:$0xff]
    %v179 = vld [vmem:[#allocation5 + $0x1f0] sm:$0xff]
    %v180 = vld [vmem:[#allocation5 + $0x1f8] sm:$0xff]
    %v181 = vld [vmem:[#allocation5 + $0x200] sm:$0xff]
    %v182 = vld [vmem:[#allocation5 + $0x208] sm:$0xff]
    %v183 = vld [vmem:[#allocation5 + $0x210] sm:$0xff]
    %v184 = vld [vmem:[#allocation5 + $0x218] sm:$0xff]
    %v185 = vld [vmem:[#allocation5 + $0x220] sm:$0xff]
    %v186 = vld [vmem:[#allocation5 + $0x228] sm:$0xff]
    %v187 = vld [vmem:[#allocation5 + $0x230] sm:$0xff]
    %v188 = vld [vmem:[#allocation5 + $0x238] sm:$0xff]
    %v189 = vld [vmem:[#allocation5 + $0x240] sm:$0xff]
    %v190 = vld [vmem:[#allocation5 + $0x248] sm:$0xff]
    %v191 = vld [vmem:[#allocation5 + $0x250] sm:$0xff]
    %v192 = vld [vmem:[#allocation5 + $0x258] sm:$0xff]
    %v193 = vld [vmem:[#allocation5 + $0x260] sm:$0xff]
    %v194 = vld [vmem:[#allocation5 + $0x268] sm:$0xff]
    %v195 = vld [vmem:[#allocation5 + $0x270] sm:$0xff]
    %v196 = vld [vmem:[#allocation5 + $0x278] sm:$0xff]
    %v197 = vld [vmem:[#allocation5 + $0x280] sm:$0xff]
    %v198 = vld [vmem:[#allocation5 + $0x288] sm:$0xff]
    %v199 = vld [vmem:[#allocation5 + $0x290] sm:$0xff]
    %v200 = vld [vmem:[#allocation5 + $0x298] sm:$0xff]
    %v201 = vld [vmem:[#allocation5 + $0x2a0] sm:$0xff]
    %v202 = vld [vmem:[#allocation5 + $0x2a8] sm:$0xff]
    %v203 = vld [vmem:[#allocation5 + $0x2b0] sm:$0xff]
    %v204 = vld [vmem:[#allocation5 + $0x2b8] sm:$0xff]
    %v205 = vld [vmem:[#allocation5 + $0x2c0] sm:$0xff]
    %v206 = vld [vmem:[#allocation5 + $0x2c8] sm:$0xff]
    %v207 = vld [vmem:[#allocation5 + $0x2d0] sm:$0xff]
    %v208 = vld [vmem:[#allocation5 + $0x2d8] sm:$0xff]
    %v209 = vld [vmem:[#allocation5 + $0x2e0] sm:$0xff]
    %v210 = vld [vmem:[#allocation5 + $0x2e8] sm:$0xff]
    %v211 = vld [vmem:[#allocation5 + $0x2f0] sm:$0xff]
    %v212 = vld [vmem:[#allocation5 + $0x2f8] sm:$0xff]
    %v213 = vld [vmem:[#allocation5 + $0x300] sm:$0xff]
    %v214 = vld [vmem:[#allocation5 + $0x308] sm:$0xff]
    %v215 = vld [vmem:[#allocation5 + $0x310] sm:$0xff]
    %v216 = vld [vmem:[#allocation5 + $0x318] sm:$0xff]
    %v217 = vld [vmem:[#allocation5 + $0x320] sm:$0xff]
    %v218 = vld [vmem:[#allocation5 + $0x328] sm:$0xff]
    %v219 = vld [vmem:[#allocation5 + $0x330] sm:$0xff]
    %v220 = vld [vmem:[#allocation5 + $0x338] sm:$0xff]
    %v221 = vld [vmem:[#allocation5 + $0x340] sm:$0xff]
    %v222 = vld [vmem:[#allocation5 + $0x348] sm:$0xff]
    %v223 = vld [vmem:[#allocation5 + $0x350] sm:$0xff]
    %v224 = vld [vmem:[#allocation5 + $0x358] sm:$0xff]
    %v225 = vld [vmem:[#allocation5 + $0x360] sm:$0xff]
    %v226 = vld [vmem:[#allocation5 + $0x368] sm:$0xff]
    %v227 = vld [vmem:[#allocation5 + $0x370] sm:$0xff]
    %v228 = vld [vmem:[#allocation5 + $0x378] sm:$0xff]
    %v229 = vld [vmem:[#allocation5 + $0x380] sm:$0xff]
    %v230 = vld [vmem:[#allocation5 + $0x388] sm:$0xff]
    %v231 = vld [vmem:[#allocation5 + $0x390] sm:$0xff]
    %v232 = vld [vmem:[#allocation5 + $0x398] sm:$0xff]
    %v233 = vld [vmem:[#allocation5 + $0x3a0] sm:$0xff]
    %v234 = vld [vmem:[#allocation5 + $0x3a8] sm:$0xff]
    %v235 = vld [vmem:[#allocation5 + $0x3b0] sm:$0xff]
    %v236 = vld [vmem:[#allocation5 + $0x3b8] sm:$0xff]
    %v237 = vld [vmem:[#allocation5 + $0x3c0] sm:$0xff]
    %v238 = vld [vmem:[#allocation5 + $0x3c8] sm:$0xff]
    %v239 = vld [vmem:[#allocation5 + $0x3d0] sm:$0xff]
    %v240 = vld [vmem:[#allocation5 + $0x3d8] sm:$0xff]
    %v241 = vld [vmem:[#allocation5 + $0x3e0] sm:$0xff]
    %v242 = vld [vmem:[#allocation5 + $0x3e8] sm:$0xff]
    %v243 = vld [vmem:[#allocation5 + $0x3f0] sm:$0xff]
    %v244 = vld [vmem:[#allocation5 + $0x3f8] sm:$0xff]
    %v245 = vld [vmem:[#allocation5 + $0x400] sm:$0xff]
    %v246 = vld [vmem:[#allocation5 + $0x408] sm:$0xff]
    %v247 = vld [vmem:[#allocation5 + $0x410] sm:$0xff]
    %v248 = vld [vmem:[#allocation5 + $0x418] sm:$0xff]
    %v249 = vld [vmem:[#allocation5 + $0x420] sm:$0xff]
    %v250 = vld [vmem:[#allocation5 + $0x428] sm:$0xff]
    %v251 = vld [vmem:[#allocation5 + $0x430] sm:$0xff]
    %v252 = vld [vmem:[#allocation5 + $0x438] sm:$0xff]
    %v253 = vld [vmem:[#allocation5 + $0x440] sm:$0xff]
    %v254 = vld [vmem:[#allocation5 + $0x448] sm:$0xff]
    %v255 = vld [vmem:[#allocation5 + $0x450] sm:$0xff]
    %v256 = vld [vmem:[#allocation5 + $0x458] sm:$0xff]
    %v257 = vld [vmem:[#allocation5 + $0x460] sm:$0xff]
    %v258 = vld [vmem:[#allocation5 + $0x468] sm:$0xff]
    %v259 = vld [vmem:[#allocation5 + $0x470] sm:$0xff]
    %v260 = vld [vmem:[#allocation5 + $0x478] sm:$0xff]
    %v261 = vld [vmem:[#allocation5 + $0x480] sm:$0xff]
    %v262 = vld [vmem:[#allocation5 + $0x488] sm:$0xff]
    %v263 = vld [vmem:[#allocation5 + $0x490] sm:$0xff]
    %v264 = vld [vmem:[#allocation5 + $0x498] sm:$0xff]
    %v265 = vld [vmem:[#allocation5 + $0x4a0] sm:$0xff]
    %v266 = vld [vmem:[#allocation5 + $0x4a8] sm:$0xff]
    %v267 = vld [vmem:[#allocation5 + $0x4b0] sm:$0xff]
    %v268 = vld [vmem:[#allocation5 + $0x4b8] sm:$0xff]
    %v269 = vld [vmem:[#allocation5 + $0x4c0] sm:$0xff]
    %v270 = vld [vmem:[#allocation5 + $0x4c8] sm:$0xff]
    %v271 = vld [vmem:[#allocation5 + $0x4d0] sm:$0xff]
    %v272 = vld [vmem:[#allocation5 + $0x4d8] sm:$0xff]
    %v273 = vld [vmem:[#allocation5 + $0x4e0] sm:$0xff]
    %v274 = vld [vmem:[#allocation5 + $0x4e8] sm:$0xff]
    %v275 = vld [vmem:[#allocation5 + $0x4f0] sm:$0xff]
    %v276 = vld [vmem:[#allocation5 + $0x4f8] sm:$0xff]
    %v277 = vld [vmem:[#allocation5 + $0x500] sm:$0xff]
    %v278 = vld [vmem:[#allocation5 + $0x508] sm:$0xff]
    %v279 = vld [vmem:[#allocation5 + $0x510] sm:$0xff]
    %v280 = vld [vmem:[#allocation5 + $0x518] sm:$0xff]
    %v281 = vld [vmem:[#allocation5 + $0x520] sm:$0xff]
    %v282 = vld [vmem:[#allocation5 + $0x528] sm:$0xff]
    %v283 = vld [vmem:[#allocation5 + $0x530] sm:$0xff]
    %v284 = vld [vmem:[#allocation5 + $0x538] sm:$0xff]
    %v285 = vld [vmem:[#allocation5 + $0x540] sm:$0xff]
    %v286 = vld [vmem:[#allocation5 + $0x548] sm:$0xff]
    %v287 = vld [vmem:[#allocation5 + $0x550] sm:$0xff]
    %v288 = vld [vmem:[#allocation5 + $0x558] sm:$0xff]
    %v289 = vld [vmem:[#allocation5 + $0x560] sm:$0xff]
    %v290 = vld [vmem:[#allocation5 + $0x568] sm:$0xff]
    %v291 = vld [vmem:[#allocation5 + $0x570] sm:$0xff]
    %v292 = vld [vmem:[#allocation5 + $0x578] sm:$0xff]
    %v293 = vld [vmem:[#allocation5 + $0x580] sm:$0xff]
    %v294 = vld [vmem:[#allocation5 + $0x588] sm:$0xff]
    %v295 = vld [vmem:[#allocation5 + $0x590] sm:$0xff]
    %v296 = vld [vmem:[#allocation5 + $0x598] sm:$0xff]
    %v297 = vld [vmem:[#allocation5 + $0x5a0] sm:$0xff]
    %v298 = vld [vmem:[#allocation5 + $0x5a8] sm:$0xff]
    %v299 = vld [vmem:[#allocation5 + $0x5b0] sm:$0xff]
    %v300 = vld [vmem:[#allocation5 + $0x5b8] sm:$0xff]
    %v301 = vld [vmem:[#allocation5 + $0x5c0] sm:$0xff]
    %v302 = vld [vmem:[#allocation5 + $0x5c8] sm:$0xff]
    %v303 = vld [vmem:[#allocation5 + $0x5d0] sm:$0xff]
    %v304 = vld [vmem:[#allocation5 + $0x5d8] sm:$0xff]
    %v305 = vld [vmem:[#allocation5 + $0x5e0] sm:$0xff]
    %v306 = vld [vmem:[#allocation5 + $0x5e8] sm:$0xff]
    %v307 = vld [vmem:[#allocation5 + $0x5f0] sm:$0xff]
    %v308 = vld [vmem:[#allocation5 + $0x5f8] sm:$0xff]
    %v309 = vld [vmem:[#allocation5 + $0x600] sm:$0xff]
    %v310 = vld [vmem:[#allocation5 + $0x608] sm:$0xff]
    %v311 = vld [vmem:[#allocation5 + $0x610] sm:$0xff]
    %v312 = vld [vmem:[#allocation5 + $0x618] sm:$0xff]
    %v313 = vld [vmem:[#allocation5 + $0x620] sm:$0xff]
    %v314 = vld [vmem:[#allocation5 + $0x628] sm:$0xff]
    %v315 = vld [vmem:[#allocation5 + $0x630] sm:$0xff]
    %v316 = vld [vmem:[#allocation5 + $0x638] sm:$0xff]
    %v317 = vld [vmem:[#allocation5 + $0x640] sm:$0xff]
    %v318 = vld [vmem:[#allocation5 + $0x648] sm:$0xff]
    %v319 = vld [vmem:[#allocation5 + $0x650] sm:$0xff]
    %v320 = vld [vmem:[#allocation5 + $0x658] sm:$0xff]
    %v321 = vld [vmem:[#allocation5 + $0x660] sm:$0xff]
    %v322 = vld [vmem:[#allocation5 + $0x668] sm:$0xff]
    %v323 = vld [vmem:[#allocation5 + $0x670] sm:$0xff]
    %v324 = vld [vmem:[#allocation5 + $0x678] sm:$0xff]
    %v325 = vld [vmem:[#allocation5 + $0x680] sm:$0xff]
    %v326 = vld [vmem:[#allocation5 + $0x688] sm:$0xff]
    %v327 = vld [vmem:[#allocation5 + $0x690] sm:$0xff]
    %v328 = vld [vmem:[#allocation5 + $0x698] sm:$0xff]
    %v329 = vld [vmem:[#allocation5 + $0x6a0] sm:$0xff]
    %v330 = vld [vmem:[#allocation5 + $0x6a8] sm:$0xff]
    %v331 = vld [vmem:[#allocation5 + $0x6b0] sm:$0xff]
    %v332 = vld [vmem:[#allocation5 + $0x6b8] sm:$0xff]
    %v333 = vld [vmem:[#allocation5 + $0x6c0] sm:$0xff]
    %v334 = vld [vmem:[#allocation5 + $0x6c8] sm:$0xff]
    %v335 = vld [vmem:[#allocation5 + $0x6d0] sm:$0xff]
    %v336 = vld [vmem:[#allocation5 + $0x6d8] sm:$0xff]
    %v337 = vld [vmem:[#allocation5 + $0x6e0] sm:$0xff]
    %v338 = vld [vmem:[#allocation5 + $0x6e8] sm:$0xff]
    %v339 = vld [vmem:[#allocation5 + $0x6f0] sm:$0xff]
    %v340 = vld [vmem:[#allocation5 + $0x6f8] sm:$0xff]
    %v341 = vld [vmem:[#allocation5 + $0x700] sm:$0xff]
    %v342 = vld [vmem:[#allocation5 + $0x708] sm:$0xff]
    %v343 = vld [vmem:[#allocation5 + $0x710] sm:$0xff]
    %v344 = vld [vmem:[#allocation5 + $0x718] sm:$0xff]
    %v345 = vld [vmem:[#allocation5 + $0x720] sm:$0xff]
    %v346 = vld [vmem:[#allocation5 + $0x728] sm:$0xff]
    %v347 = vld [vmem:[#allocation5 + $0x730] sm:$0xff]
    %v348 = vld [vmem:[#allocation5 + $0x738] sm:$0xff]
    %v349 = vld [vmem:[#allocation5 + $0x740] sm:$0xff]
    %v350 = vld [vmem:[#allocation5 + $0x748] sm:$0xff]
    %v351 = vld [vmem:[#allocation5 + $0x750] sm:$0xff]
    %v352 = vld [vmem:[#allocation5 + $0x758] sm:$0xff]
    %v353 = vld [vmem:[#allocation5 + $0x760] sm:$0xff]
    %v354 = vld [vmem:[#allocation5 + $0x768] sm:$0xff]
    %v355 = vld [vmem:[#allocation5 + $0x770] sm:$0xff]
    %v356 = vld [vmem:[#allocation5 + $0x778] sm:$0xff]
    %v357 = vld [vmem:[#allocation5 + $0x780] sm:$0xff]
    %v358 = vld [vmem:[#allocation5 + $0x788] sm:$0xff]
    %v359 = vld [vmem:[#allocation5 + $0x790] sm:$0xff]
    %v360 = vld [vmem:[#allocation5 + $0x798] sm:$0xff]
    %v361 = vld [vmem:[#allocation5 + $0x7a0] sm:$0xff]
    %v362 = vld [vmem:[#allocation5 + $0x7a8] sm:$0xff]
    %v363 = vld [vmem:[#allocation5 + $0x7b0] sm:$0xff]
    %v364 = vld [vmem:[#allocation5 + $0x7b8] sm:$0xff]
    %v365 = vld [vmem:[#allocation5 + $0x7c0] sm:$0xff]
    %v366 = vld [vmem:[#allocation5 + $0x7c8] sm:$0xff]
    %v367 = vld [vmem:[#allocation5 + $0x7d0] sm:$0xff]
    %v368 = vld [vmem:[#allocation5 + $0x7d8] sm:$0xff]
    %v369 = vld [vmem:[#allocation5 + $0x7e0] sm:$0xff]
    %v370 = vld [vmem:[#allocation5 + $0x7e8] sm:$0xff]
    %v371 = vld [vmem:[#allocation5 + $0x7f0] sm:$0xff]
    %v372 = vld [vmem:[#allocation5 + $0x7f8] sm:$0xff]
    %v373 = vld [vmem:[#allocation5 + $0x800] sm:$0xff]
    %v374 = vld [vmem:[#allocation5 + $0x808] sm:$0xff]
    %v375 = vld [vmem:[#allocation5 + $0x810] sm:$0xff]
    %v376 = vld [vmem:[#allocation5 + $0x818] sm:$0xff]
    %v377 = vld [vmem:[#allocation5 + $0x820] sm:$0xff]
    %v378 = vld [vmem:[#allocation5 + $0x828] sm:$0xff]
    %v379 = vld [vmem:[#allocation5 + $0x830] sm:$0xff]
    %v380 = vld [vmem:[#allocation5 + $0x838] sm:$0xff]
    %v381 = vld [vmem:[#allocation5 + $0x840] sm:$0xff]
    %v382 = vld [vmem:[#allocation5 + $0x848] sm:$0xff]
    %v383 = vld [vmem:[#allocation5 + $0x850] sm:$0xff]
    %v384 = vld [vmem:[#allocation5 + $0x858] sm:$0xff]
    %v385 = vld [vmem:[#allocation5 + $0x860] sm:$0xff]
    %v386 = vld [vmem:[#allocation5 + $0x868] sm:$0xff]
    %v387 = vld [vmem:[#allocation5 + $0x870] sm:$0xff]
    %v388 = vld [vmem:[#allocation5 + $0x878] sm:$0xff]
    %v389 = vld [vmem:[#allocation5 + $0x880] sm:$0xff]
    %v390 = vld [vmem:[#allocation5 + $0x888] sm:$0xff]
    %v391 = vld [vmem:[#allocation5 + $0x890] sm:$0xff]
    %v392 = vld [vmem:[#allocation5 + $0x898] sm:$0xff]
    %v393 = vld [vmem:[#allocation5 + $0x8a0] sm:$0xff]
    %v394 = vld [vmem:[#allocation5 + $0x8a8] sm:$0xff]
    %v395 = vld [vmem:[#allocation5 + $0x8b0] sm:$0xff]
    %v396 = vld [vmem:[#allocation5 + $0x8b8] sm:$0xff]
    %v397 = vld [vmem:[#allocation5 + $0x8c0] sm:$0xff]
    %v398 = vld [vmem:[#allocation5 + $0x8c8] sm:$0xff]
    %v399 = vld [vmem:[#allocation5 + $0x8d0] sm:$0xff]
    %v400 = vld [vmem:[#allocation5 + $0x8d8] sm:$0xff]
    %v401 = vld [vmem:[#allocation5 + $0x8e0] sm:$0xff]
    %v402 = vld [vmem:[#allocation5 + $0x8e8] sm:$0xff]
    %v403 = vld [vmem:[#allocation5 + $0x8f0] sm:$0xff]
    %v404 = vld [vmem:[#allocation5 + $0x8f8] sm:$0xff]
    %v405 = vld [vmem:[#allocation5 + $0x900] sm:$0xff]
    %v406 = vld [vmem:[#allocation5 + $0x908] sm:$0xff]
    %v407 = vld [vmem:[#allocation5 + $0x910] sm:$0xff]
    %v408 = vld [vmem:[#allocation5 + $0x918] sm:$0xff]
    %v409 = vld [vmem:[#allocation5 + $0x920] sm:$0xff]
    %v410 = vld [vmem:[#allocation5 + $0x928] sm:$0xff]
    %v411 = vld [vmem:[#allocation5 + $0x930] sm:$0xff]
    %v412 = vld [vmem:[#allocation5 + $0x938] sm:$0xff]
    %v413 = vld [vmem:[#allocation5 + $0x940] sm:$0xff]
    %v414 = vld [vmem:[#allocation5 + $0x948] sm:$0xff]
    %v415 = vld [vmem:[#allocation5 + $0x950] sm:$0xff]
    %v416 = vld [vmem:[#allocation5 + $0x958] sm:$0xff]
    %v417 = vld [vmem:[#allocation5 + $0x960] sm:$0xff]
    %v418 = vld [vmem:[#allocation5 + $0x968] sm:$0xff]
    %v419 = vld [vmem:[#allocation5 + $0x970] sm:$0xff]
    %v420 = vld [vmem:[#allocation5 + $0x978] sm:$0xff]
    %v421 = vld [vmem:[#allocation5 + $0x980] sm:$0xff]
    %v422 = vld [vmem:[#allocation5 + $0x988] sm:$0xff]
    %v423 = vld [vmem:[#allocation5 + $0x990] sm:$0xff]
    %v424 = vld [vmem:[#allocation5 + $0x998] sm:$0xff]
    %v425 = vld [vmem:[#allocation5 + $0x9a0] sm:$0xff]
    %v426 = vld [vmem:[#allocation5 + $0x9a8] sm:$0xff]
    %v427 = vld [vmem:[#allocation5 + $0x9b0] sm:$0xff]
    %v428 = vld [vmem:[#allocation5 + $0x9b8] sm:$0xff]
    %v429 = vld [vmem:[#allocation5 + $0x9c0] sm:$0xff]
    %v430 = vld [vmem:[#allocation5 + $0x9c8] sm:$0xff]
    %v431 = vld [vmem:[#allocation5 + $0x9d0] sm:$0xff]
    %v432 = vld [vmem:[#allocation5 + $0x9d8] sm:$0xff]
    %v433 = vld [vmem:[#allocation5 + $0x9e0] sm:$0xff]
    %v434 = vld [vmem:[#allocation5 + $0x9e8] sm:$0xff]
    %v435 = vld [vmem:[#allocation5 + $0x9f0] sm:$0xff]
    %v436 = vld [vmem:[#allocation5 + $0x9f8] sm:$0xff]
    %v437 = vld [vmem:[#allocation5 + $0xa00] sm:$0xff]
    %v438 = vld [vmem:[#allocation5 + $0xa08] sm:$0xff]
    %v439 = vld [vmem:[#allocation5 + $0xa10] sm:$0xff]
    %v440 = vld [vmem:[#allocation5 + $0xa18] sm:$0xff]
    %v441 = vld [vmem:[#allocation5 + $0xa20] sm:$0xff]
    %v442 = vld [vmem:[#allocation5 + $0xa28] sm:$0xff]
    %v443 = vld [vmem:[#allocation5 + $0xa30] sm:$0xff]
    %v444 = vld [vmem:[#allocation5 + $0xa38] sm:$0xff]
    %v445 = vld [vmem:[#allocation5 + $0xa40] sm:$0xff]
    %v446 = vld [vmem:[#allocation5 + $0xa48] sm:$0xff]
    %v447 = vld [vmem:[#allocation5 + $0xa50] sm:$0xff]
    %v448 = vld [vmem:[#allocation5 + $0xa58] sm:$0xff]
    %v449 = vld [vmem:[#allocation5 + $0xa60] sm:$0xff]
    %v450 = vld [vmem:[#allocation5 + $0xa68] sm:$0xff]
    %v451 = vld [vmem:[#allocation5 + $0xa70] sm:$0xff]
    %v452 = vld [vmem:[#allocation5 + $0xa78] sm:$0xff]
    %v453 = vld [vmem:[#allocation5 + $0xa80] sm:$0xff]
    %v454 = vld [vmem:[#allocation5 + $0xa88] sm:$0xff]
    %v455 = vld [vmem:[#allocation5 + $0xa90] sm:$0xff]
    %v456 = vld [vmem:[#allocation5 + $0xa98] sm:$0xff]
    %v457 = vld [vmem:[#allocation5 + $0xaa0] sm:$0xff]
    %v458 = vld [vmem:[#allocation5 + $0xaa8] sm:$0xff]
    %v459 = vld [vmem:[#allocation5 + $0xab0] sm:$0xff]
    %v460 = vld [vmem:[#allocation5 + $0xab8] sm:$0xff]
    %v461 = vld [vmem:[#allocation5 + $0xac0] sm:$0xff]
    %v462 = vld [vmem:[#allocation5 + $0xac8] sm:$0xff]
    %v463 = vld [vmem:[#allocation5 + $0xad0] sm:$0xff]
    %v464 = vld [vmem:[#allocation5 + $0xad8] sm:$0xff]
    %v465 = vld [vmem:[#allocation5 + $0xae0] sm:$0xff]
    %v466 = vld [vmem:[#allocation5 + $0xae8] sm:$0xff]
    %v467 = vld [vmem:[#allocation5 + $0xaf0] sm:$0xff]
    %v468 = vld [vmem:[#allocation5 + $0xaf8] sm:$0xff]
    %v469 = vld [vmem:[#allocation5 + $0xb00] sm:$0xff]
    %v470 = vld [vmem:[#allocation5 + $0xb08] sm:$0xff]
    %v471 = vld [vmem:[#allocation5 + $0xb10] sm:$0xff]
    %v472 = vld [vmem:[#allocation5 + $0xb18] sm:$0xff]
    %v473 = vld [vmem:[#allocation5 + $0xb20] sm:$0xff]
    %v474 = vld [vmem:[#allocation5 + $0xb28] sm:$0xff]
    %v475 = vld [vmem:[#allocation5 + $0xb30] sm:$0xff]
    %v476 = vld [vmem:[#allocation5 + $0xb38] sm:$0xff]
    %v477 = vld [vmem:[#allocation5 + $0xb40] sm:$0xff]
    %v478 = vld [vmem:[#allocation5 + $0xb48] sm:$0xff]
    %v479 = vld [vmem:[#allocation5 + $0xb50] sm:$0xff]
    %v480 = vld [vmem:[#allocation5 + $0xb58] sm:$0xff]
    %v481 = vld [vmem:[#allocation5 + $0xb60] sm:$0xff]
    %v482 = vld [vmem:[#allocation5 + $0xb68] sm:$0xff]
    %v483 = vld [vmem:[#allocation5 + $0xb70] sm:$0xff]
    %v484 = vld [vmem:[#allocation5 + $0xb78] sm:$0xff]
    %v485 = vld [vmem:[#allocation5 + $0xb80] sm:$0xff]
    %v486 = vld [vmem:[#allocation5 + $0xb88] sm:$0xff]
    %v487 = vld [vmem:[#allocation5 + $0xb90] sm:$0xff]
    %v488 = vld [vmem:[#allocation5 + $0xb98] sm:$0xff]
    %v489 = vld [vmem:[#allocation5 + $0xba0] sm:$0xff]
    %v490 = vld [vmem:[#allocation5 + $0xba8] sm:$0xff]
    %v491 = vld [vmem:[#allocation5 + $0xbb0] sm:$0xff]
    %v492 = vld [vmem:[#allocation5 + $0xbb8] sm:$0xff]
    %v493 = vld [vmem:[#allocation5 + $0xbc0] sm:$0xff]
    %v494 = vld [vmem:[#allocation5 + $0xbc8] sm:$0xff]
    %v495 = vld [vmem:[#allocation5 + $0xbd0] sm:$0xff]
    %v496 = vld [vmem:[#allocation5 + $0xbd8] sm:$0xff]
    %v497 = vld [vmem:[#allocation5 + $0xbe0] sm:$0xff]
    %v498 = vld [vmem:[#allocation5 + $0xbe8] sm:$0xff]
    %v499 = vld [vmem:[#allocation5 + $0xbf0] sm:$0xff]
    %v500 = vld [vmem:[#allocation5 + $0xbf8] sm:$0xff]
    %v501 = vld [vmem:[#allocation7] sm:$0x1]
    %v503 = vperm.slane %v501, 0
    %505 = vmatpush.msra.mxu0 %v132
    %506 = vmatpush.msra.mxu0 %v131
    %507 = vmatpush.msra.mxu0 %v130
    %508 = vmatpush.msra.mxu0 %v129
    %509 = vmatpush.msra.mxu0 %v128
    %510 = vmatpush.msra.mxu0 %v127
    %511 = vmatpush.msra.mxu0 %v126
    %512 = vmatpush.msra.mxu0 %v125
    %513 = vmatpush.msra.mxu0 %v124
    %514 = vmatpush.msra.mxu0 %v123
    %515 = vmatpush.msra.mxu0 %v122
    %516 = vmatpush.msra.mxu0 %v121
    %517 = vmatpush.msra.mxu0 %v120
    %518 = vmatpush.msra.mxu0 %v119
    %519 = vmatpush.msra.mxu0 %v118
    %520 = vmatpush.msra.mxu0 %v117
    %521 = vmatmul.f32.gmra.mxu0 %v93
    %v522 = vpop.f32.mrf.mxu0
    %v523 = vadd.f32 %v503, %v522
    %524 = vdwg.mxu0
    %525 = vmatpush.msra.mxu0 %v148
    %526 = vmatpush.msra.mxu0 %v147
    %527 = vmatpush.msra.mxu0 %v146
    %528 = vmatpush.msra.mxu0 %v145
    %529 = vmatpush.msra.mxu0 %v144
    %530 = vmatpush.msra.mxu0 %v143
    %531 = vmatpush.msra.mxu0 %v142
    %532 = vmatpush.msra.mxu0 %v141
    %533 = vmatpush.msra.mxu0 %v140
    %534 = vmatpush.msra.mxu0 %v139
    %535 = vmatpush.msra.mxu0 %v138
    %536 = vmatpush.msra.mxu0 %v137
    %537 = vmatpush.msra.mxu0 %v136
    %538 = vmatpush.msra.mxu0 %v135
    %539 = vmatpush.msra.mxu0 %v134
    %540 = vmatpush.msra.mxu0 %v133
    %541 = vmatmul.f32.gmra.mxu0 %v94
    %v542 = vpop.f32.mrf.mxu0
    %v543 = vadd.f32 %v523, %v542
    %544 = vdwg.mxu0
    %545 = vmatpush.msra.mxu0 %v164
    %546 = vmatpush.msra.mxu0 %v163
    %547 = vmatpush.msra.mxu0 %v162
    %548 = vmatpush.msra.mxu0 %v161
    %549 = vmatpush.msra.mxu0 %v160
    %550 = vmatpush.msra.mxu0 %v159
    %551 = vmatpush.msra.mxu0 %v158
    %552 = vmatpush.msra.mxu0 %v157
    %553 = vmatpush.msra.mxu0 %v156
    %554 = vmatpush.msra.mxu0 %v155
    %555 = vmatpush.msra.mxu0 %v154
    %556 = vmatpush.msra.mxu0 %v153
    %557 = vmatpush.msra.mxu0 %v152
    %558 = vmatpush.msra.mxu0 %v151
    %559 = vmatpush.msra.mxu0 %v150
    %560 = vmatpush.msra.mxu0 %v149
    %561 = vmatmul.f32.gmra.mxu0 %v95
    %v562 = vpop.f32.mrf.mxu0
    %v563 = vadd.f32 %v543, %v562
    %564 = vdwg.mxu0
    %565 = vmatpush.msra.mxu0 %v180
    %566 = vmatpush.msra.mxu0 %v179
    %567 = vmatpush.msra.mxu0 %v178
    %568 = vmatpush.msra.mxu0 %v177
    %569 = vmatpush.msra.mxu0 %v176
    %570 = vmatpush.msra.mxu0 %v175
    %571 = vmatpush.msra.mxu0 %v174
    %572 = vmatpush.msra.mxu0 %v173
    %573 = vmatpush.msra.mxu0 %v172
    %574 = vmatpush.msra.mxu0 %v171
    %575 = vmatpush.msra.mxu0 %v170
    %576 = vmatpush.msra.mxu0 %v169
    %577 = vmatpush.msra.mxu0 %v168
    %578 = vmatpush.msra.mxu0 %v167
    %579 = vmatpush.msra.mxu0 %v166
    %580 = vmatpush.msra.mxu0 %v165
    %581 = vmatmul.f32.gmra.mxu0 %v96
    %v582 = vpop.f32.mrf.mxu0
    %v583 = vadd.f32 %v563, %v582
    %584 = vdwg.mxu0
    %585 = vmatpush.msra.mxu0 %v196
    %586 = vmatpush.msra.mxu0 %v195
    %587 = vmatpush.msra.mxu0 %v194
    %588 = vmatpush.msra.mxu0 %v193
    %589 = vmatpush.msra.mxu0 %v192
    %590 = vmatpush.msra.mxu0 %v191
    %591 = vmatpush.msra.mxu0 %v190
    %592 = vmatpush.msra.mxu0 %v189
    %593 = vmatpush.msra.mxu0 %v188
    %594 = vmatpush.msra.mxu0 %v187
    %595 = vmatpush.msra.mxu0 %v186
    %596 = vmatpush.msra.mxu0 %v185
    %597 = vmatpush.msra.mxu0 %v184
    %598 = vmatpush.msra.mxu0 %v183
    %599 = vmatpush.msra.mxu0 %v182
    %600 = vmatpush.msra.mxu0 %v181
    %601 = vmatmul.f32.gmra.mxu0 %v97
    %v602 = vpop.f32.mrf.mxu0
    %v603 = vadd.f32 %v583, %v602
    %604 = vdwg.mxu0
    %605 = vmatpush.msra.mxu0 %v212
    %606 = vmatpush.msra.mxu0 %v211
    %607 = vmatpush.msra.mxu0 %v210
    %608 = vmatpush.msra.mxu0 %v209
    %609 = vmatpush.msra.mxu0 %v208
    %610 = vmatpush.msra.mxu0 %v207
    %611 = vmatpush.msra.mxu0 %v206
    %612 = vmatpush.msra.mxu0 %v205
    %613 = vmatpush.msra.mxu0 %v204
    %614 = vmatpush.msra.mxu0 %v203
    %615 = vmatpush.msra.mxu0 %v202
    %616 = vmatpush.msra.mxu0 %v201
    %617 = vmatpush.msra.mxu0 %v200
    %618 = vmatpush.msra.mxu0 %v199
    %619 = vmatpush.msra.mxu0 %v198
    %620 = vmatpush.msra.mxu0 %v197
    %621 = vmatmul.f32.gmra.mxu0 %v98
    %v622 = vpop.f32.mrf.mxu0
    %v623 = vadd.f32 %v603, %v622
    %624 = vdwg.mxu0
    %625 = vmatpush.msra.mxu0 %v228
    %626 = vmatpush.msra.mxu0 %v227
    %627 = vmatpush.msra.mxu0 %v226
    %628 = vmatpush.msra.mxu0 %v225
    %629 = vmatpush.msra.mxu0 %v224
    %630 = vmatpush.msra.mxu0 %v223
    %631 = vmatpush.msra.mxu0 %v222
    %632 = vmatpush.msra.mxu0 %v221
    %633 = vmatpush.msra.mxu0 %v220
    %634 = vmatpush.msra.mxu0 %v219
    %635 = vmatpush.msra.mxu0 %v218
    %636 = vmatpush.msra.mxu0 %v217
    %637 = vmatpush.msra.mxu0 %v216
    %638 = vmatpush.msra.mxu0 %v215
    %639 = vmatpush.msra.mxu0 %v214
    %640 = vmatpush.msra.mxu0 %v213
    %641 = vmatmul.f32.gmra.mxu0 %v99
    %v642 = vpop.f32.mrf.mxu0
    %v643 = vadd.f32 %v623, %v642
    %644 = vdwg.mxu0
    %645 = vmatpush.msra.mxu0 %v244
    %646 = vmatpush.msra.mxu0 %v243
    %647 = vmatpush.msra.mxu0 %v242
    %648 = vmatpush.msra.mxu0 %v241
    %649 = vmatpush.msra.mxu0 %v240
    %650 = vmatpush.msra.mxu0 %v239
    %651 = vmatpush.msra.mxu0 %v238
    %652 = vmatpush.msra.mxu0 %v237
    %653 = vmatpush.msra.mxu0 %v236
    %654 = vmatpush.msra.mxu0 %v235
    %655 = vmatpush.msra.mxu0 %v234
    %656 = vmatpush.msra.mxu0 %v233
    %657 = vmatpush.msra.mxu0 %v232
    %658 = vmatpush.msra.mxu0 %v231
    %659 = vmatpush.msra.mxu0 %v230
    %660 = vmatpush.msra.mxu0 %v229
    %661 = vmatmul.f32.gmra.mxu0 %v100
    %v662 = vpop.f32.mrf.mxu0
    %v663 = vadd.f32 %v643, %v662
    %664 = vdwg.mxu0
    %665 = vmatpush.msra.mxu0 %v260
    %666 = vmatpush.msra.mxu0 %v259
    %667 = vmatpush.msra.mxu0 %v258
    %668 = vmatpush.msra.mxu0 %v257
    %669 = vmatpush.msra.mxu0 %v256
    %670 = vmatpush.msra.mxu0 %v255
    %671 = vmatpush.msra.mxu0 %v254
    %672 = vmatpush.msra.mxu0 %v253
    %673 = vmatpush.msra.mxu0 %v252
    %674 = vmatpush.msra.mxu0 %v251
    %675 = vmatpush.msra.mxu0 %v250
    %676 = vmatpush.msra.mxu0 %v249
    %677 = vmatpush.msra.mxu0 %v248
    %678 = vmatpush.msra.mxu0 %v247
    %679 = vmatpush.msra.mxu0 %v246
    %680 = vmatpush.msra.mxu0 %v245
    %681 = vmatmul.f32.gmra.mxu0 %v101
    %v682 = vpop.f32.mrf.mxu0
    %v683 = vadd.f32 %v663, %v682
    %684 = vdwg.mxu0
    %685 = vmatpush.msra.mxu0 %v276
    %686 = vmatpush.msra.mxu0 %v275
    %687 = vmatpush.msra.mxu0 %v274
    %688 = vmatpush.msra.mxu0 %v273
    %689 = vmatpush.msra.mxu0 %v272
    %690 = vmatpush.msra.mxu0 %v271
    %691 = vmatpush.msra.mxu0 %v270
    %692 = vmatpush.msra.mxu0 %v269
    %693 = vmatpush.msra.mxu0 %v268
    %694 = vmatpush.msra.mxu0 %v267
    %695 = vmatpush.msra.mxu0 %v266
    %696 = vmatpush.msra.mxu0 %v265
    %697 = vmatpush.msra.mxu0 %v264
    %698 = vmatpush.msra.mxu0 %v263
    %699 = vmatpush.msra.mxu0 %v262
    %700 = vmatpush.msra.mxu0 %v261
    %701 = vmatmul.f32.gmra.mxu0 %v102
    %v702 = vpop.f32.mrf.mxu0
    %v703 = vadd.f32 %v683, %v702
    %704 = vdwg.mxu0
    %705 = vmatpush.msra.mxu0 %v292
    %706 = vmatpush.msra.mxu0 %v291
    %707 = vmatpush.msra.mxu0 %v290
    %708 = vmatpush.msra.mxu0 %v289
    %709 = vmatpush.msra.mxu0 %v288
    %710 = vmatpush.msra.mxu0 %v287
    %711 = vmatpush.msra.mxu0 %v286
    %712 = vmatpush.msra.mxu0 %v285
    %713 = vmatpush.msra.mxu0 %v284
    %714 = vmatpush.msra.mxu0 %v283
    %715 = vmatpush.msra.mxu0 %v282
    %716 = vmatpush.msra.mxu0 %v281
    %717 = vmatpush.msra.mxu0 %v280
    %718 = vmatpush.msra.mxu0 %v279
    %719 = vmatpush.msra.mxu0 %v278
    %720 = vmatpush.msra.mxu0 %v277
    %721 = vmatmul.f32.gmra.mxu0 %v103
    %v722 = vpop.f32.mrf.mxu0
    %v723 = vadd.f32 %v703, %v722
    %724 = vdwg.mxu0
    %725 = vmatpush.msra.mxu0 %v308
    %726 = vmatpush.msra.mxu0 %v307
    %727 = vmatpush.msra.mxu0 %v306
    %728 = vmatpush.msra.mxu0 %v305
    %729 = vmatpush.msra.mxu0 %v304
    %730 = vmatpush.msra.mxu0 %v303
    %731 = vmatpush.msra.mxu0 %v302
    %732 = vmatpush.msra.mxu0 %v301
    %733 = vmatpush.msra.mxu0 %v300
    %734 = vmatpush.msra.mxu0 %v299
    %735 = vmatpush.msra.mxu0 %v298
    %736 = vmatpush.msra.mxu0 %v297
    %737 = vmatpush.msra.mxu0 %v296
    %738 = vmatpush.msra.mxu0 %v295
    %739 = vmatpush.msra.mxu0 %v294
    %740 = vmatpush.msra.mxu0 %v293
    %741 = vmatmul.f32.gmra.mxu0 %v104
    %v742 = vpop.f32.mrf.mxu0
    %v743 = vadd.f32 %v723, %v742
    %744 = vdwg.mxu0
    %745 = vmatpush.msra.mxu0 %v324
    %746 = vmatpush.msra.mxu0 %v323
    %747 = vmatpush.msra.mxu0 %v322
    %748 = vmatpush.msra.mxu0 %v321
    %749 = vmatpush.msra.mxu0 %v320
    %750 = vmatpush.msra.mxu0 %v319
    %751 = vmatpush.msra.mxu0 %v318
    %752 = vmatpush.msra.mxu0 %v317
    %753 = vmatpush.msra.mxu0 %v316
    %754 = vmatpush.msra.mxu0 %v315
    %755 = vmatpush.msra.mxu0 %v314
    %756 = vmatpush.msra.mxu0 %v313
    %757 = vmatpush.msra.mxu0 %v312
    %758 = vmatpush.msra.mxu0 %v311
    %759 = vmatpush.msra.mxu0 %v310
    %760 = vmatpush.msra.mxu0 %v309
    %761 = vmatmul.f32.gmra.mxu0 %v105
    %v762 = vpop.f32.mrf.mxu0
    %v763 = vadd.f32 %v743, %v762
    %764 = vdwg.mxu0
    %765 = vmatpush.msra.mxu0 %v340
    %766 = vmatpush.msra.mxu0 %v339
    %767 = vmatpush.msra.mxu0 %v338
    %768 = vmatpush.msra.mxu0 %v337
    %769 = vmatpush.msra.mxu0 %v336
    %770 = vmatpush.msra.mxu0 %v335
    %771 = vmatpush.msra.mxu0 %v334
    %772 = vmatpush.msra.mxu0 %v333
    %773 = vmatpush.msra.mxu0 %v332
    %774 = vmatpush.msra.mxu0 %v331
    %775 = vmatpush.msra.mxu0 %v330
    %776 = vmatpush.msra.mxu0 %v329
    %777 = vmatpush.msra.mxu0 %v328
    %778 = vmatpush.msra.mxu0 %v327
    %779 = vmatpush.msra.mxu0 %v326
    %780 = vmatpush.msra.mxu0 %v325
    %781 = vmatmul.f32.gmra.mxu0 %v106
    %v782 = vpop.f32.mrf.mxu0
    %v783 = vadd.f32 %v763, %v782
    %784 = vdwg.mxu0
    %785 = vmatpush.msra.mxu0 %v356
    %786 = vmatpush.msra.mxu0 %v355
    %787 = vmatpush.msra.mxu0 %v354
    %788 = vmatpush.msra.mxu0 %v353
    %789 = vmatpush.msra.mxu0 %v352
    %790 = vmatpush.msra.mxu0 %v351
    %791 = vmatpush.msra.mxu0 %v350
    %792 = vmatpush.msra.mxu0 %v349
    %793 = vmatpush.msra.mxu0 %v348
    %794 = vmatpush.msra.mxu0 %v347
    %795 = vmatpush.msra.mxu0 %v346
    %796 = vmatpush.msra.mxu0 %v345
    %797 = vmatpush.msra.mxu0 %v344
    %798 = vmatpush.msra.mxu0 %v343
    %799 = vmatpush.msra.mxu0 %v342
    %800 = vmatpush.msra.mxu0 %v341
    %801 = vmatmul.f32.gmra.mxu0 %v107
    %v802 = vpop.f32.mrf.mxu0
    %v803 = vadd.f32 %v783, %v802
    %804 = vdwg.mxu0
    %805 = vmatpush.msra.mxu0 %v372
    %806 = vmatpush.msra.mxu0 %v371
    %807 = vmatpush.msra.mxu0 %v370
    %808 = vmatpush.msra.mxu0 %v369
    %809 = vmatpush.msra.mxu0 %v368
    %810 = vmatpush.msra.mxu0 %v367
    %811 = vmatpush.msra.mxu0 %v366
    %812 = vmatpush.msra.mxu0 %v365
    %813 = vmatpush.msra.mxu0 %v364
    %814 = vmatpush.msra.mxu0 %v363
    %815 = vmatpush.msra.mxu0 %v362
    %816 = vmatpush.msra.mxu0 %v361
    %817 = vmatpush.msra.mxu0 %v360
    %818 = vmatpush.msra.mxu0 %v359
    %819 = vmatpush.msra.mxu0 %v358
    %820 = vmatpush.msra.mxu0 %v357
    %821 = vmatmul.f32.gmra.mxu0 %v108
    %v822 = vpop.f32.mrf.mxu0
    %v823 = vadd.f32 %v803, %v822
    %824 = vdwg.mxu0
    %825 = vmatpush.msra.mxu0 %v388
    %826 = vmatpush.msra.mxu0 %v387
    %827 = vmatpush.msra.mxu0 %v386
    %828 = vmatpush.msra.mxu0 %v385
    %829 = vmatpush.msra.mxu0 %v384
    %830 = vmatpush.msra.mxu0 %v383
    %831 = vmatpush.msra.mxu0 %v382
    %832 = vmatpush.msra.mxu0 %v381
    %833 = vmatpush.msra.mxu0 %v380
    %834 = vmatpush.msra.mxu0 %v379
    %835 = vmatpush.msra.mxu0 %v378
    %836 = vmatpush.msra.mxu0 %v377
    %837 = vmatpush.msra.mxu0 %v376
    %838 = vmatpush.msra.mxu0 %v375
    %839 = vmatpush.msra.mxu0 %v374
    %840 = vmatpush.msra.mxu0 %v373
    %841 = vmatmul.f32.gmra.mxu0 %v109
    %v842 = vpop.f32.mrf.mxu0
    %v843 = vadd.f32 %v823, %v842
    %844 = vdwg.mxu0
    %845 = vmatpush.msra.mxu0 %v404
    %846 = vmatpush.msra.mxu0 %v403
    %847 = vmatpush.msra.mxu0 %v402
    %848 = vmatpush.msra.mxu0 %v401
    %849 = vmatpush.msra.mxu0 %v400
    %850 = vmatpush.msra.mxu0 %v399
    %851 = vmatpush.msra.mxu0 %v398
    %852 = vmatpush.msra.mxu0 %v397
    %853 = vmatpush.msra.mxu0 %v396
    %854 = vmatpush.msra.mxu0 %v395
    %855 = vmatpush.msra.mxu0 %v394
    %856 = vmatpush.msra.mxu0 %v393
    %857 = vmatpush.msra.mxu0 %v392
    %858 = vmatpush.msra.mxu0 %v391
    %859 = vmatpush.msra.mxu0 %v390
    %860 = vmatpush.msra.mxu0 %v389
    %861 = vmatmul.f32.gmra.mxu0 %v110
    %v862 = vpop.f32.mrf.mxu0
    %v863 = vadd.f32 %v843, %v862
    %864 = vdwg.mxu0
    %865 = vmatpush.msra.mxu0 %v420
    %866 = vmatpush.msra.mxu0 %v419
    %867 = vmatpush.msra.mxu0 %v418
    %868 = vmatpush.msra.mxu0 %v417
    %869 = vmatpush.msra.mxu0 %v416
    %870 = vmatpush.msra.mxu0 %v415
    %871 = vmatpush.msra.mxu0 %v414
    %872 = vmatpush.msra.mxu0 %v413
    %873 = vmatpush.msra.mxu0 %v412
    %874 = vmatpush.msra.mxu0 %v411
    %875 = vmatpush.msra.mxu0 %v410
    %876 = vmatpush.msra.mxu0 %v409
    %877 = vmatpush.msra.mxu0 %v408
    %878 = vmatpush.msra.mxu0 %v407
    %879 = vmatpush.msra.mxu0 %v406
    %880 = vmatpush.msra.mxu0 %v405
    %881 = vmatmul.f32.gmra.mxu0 %v111
    %v882 = vpop.f32.mrf.mxu0
    %v883 = vadd.f32 %v863, %v882
    %884 = vdwg.mxu0
    %885 = vmatpush.msra.mxu0 %v436
    %886 = vmatpush.msra.mxu0 %v435
    %887 = vmatpush.msra.mxu0 %v434
    %888 = vmatpush.msra.mxu0 %v433
    %889 = vmatpush.msra.mxu0 %v432
    %890 = vmatpush.msra.mxu0 %v431
    %891 = vmatpush.msra.mxu0 %v430
    %892 = vmatpush.msra.mxu0 %v429
    %893 = vmatpush.msra.mxu0 %v428
    %894 = vmatpush.msra.mxu0 %v427
    %895 = vmatpush.msra.mxu0 %v426
    %896 = vmatpush.msra.mxu0 %v425
    %897 = vmatpush.msra.mxu0 %v424
    %898 = vmatpush.msra.mxu0 %v423
    %899 = vmatpush.msra.mxu0 %v422
    %900 = vmatpush.msra.mxu0 %v421
    %901 = vmatmul.f32.gmra.mxu0 %v112
    %v902 = vpop.f32.mrf.mxu0
    %v903 = vadd.f32 %v883, %v902
    %904 = vdwg.mxu0
    %905 = vmatpush.msra.mxu0 %v452
    %906 = vmatpush.msra.mxu0 %v451
    %907 = vmatpush.msra.mxu0 %v450
    %908 = vmatpush.msra.mxu0 %v449
    %909 = vmatpush.msra.mxu0 %v448
    %910 = vmatpush.msra.mxu0 %v447
    %911 = vmatpush.msra.mxu0 %v446
    %912 = vmatpush.msra.mxu0 %v445
    %913 = vmatpush.msra.mxu0 %v444
    %914 = vmatpush.msra.mxu0 %v443
    %915 = vmatpush.msra.mxu0 %v442
    %916 = vmatpush.msra.mxu0 %v441
    %917 = vmatpush.msra.mxu0 %v440
    %918 = vmatpush.msra.mxu0 %v439
    %919 = vmatpush.msra.mxu0 %v438
    %920 = vmatpush.msra.mxu0 %v437
    %921 = vmatmul.f32.gmra.mxu0 %v113
    %v922 = vpop.f32.mrf.mxu0
    %v923 = vadd.f32 %v903, %v922
    %924 = vdwg.mxu0
    %925 = vmatpush.msra.mxu0 %v468
    %926 = vmatpush.msra.mxu0 %v467
    %927 = vmatpush.msra.mxu0 %v466
    %928 = vmatpush.msra.mxu0 %v465
    %929 = vmatpush.msra.mxu0 %v464
    %930 = vmatpush.msra.mxu0 %v463
    %931 = vmatpush.msra.mxu0 %v462
    %932 = vmatpush.msra.mxu0 %v461
    %933 = vmatpush.msra.mxu0 %v460
    %934 = vmatpush.msra.mxu0 %v459
    %935 = vmatpush.msra.mxu0 %v458
    %936 = vmatpush.msra.mxu0 %v457
    %937 = vmatpush.msra.mxu0 %v456
    %938 = vmatpush.msra.mxu0 %v455
    %939 = vmatpush.msra.mxu0 %v454
    %940 = vmatpush.msra.mxu0 %v453
    %941 = vmatmul.f32.gmra.mxu0 %v114
    %v942 = vpop.f32.mrf.mxu0
    %v943 = vadd.f32 %v923, %v942
    %944 = vdwg.mxu0
    %945 = vmatpush.msra.mxu0 %v484
    %946 = vmatpush.msra.mxu0 %v483
    %947 = vmatpush.msra.mxu0 %v482
    %948 = vmatpush.msra.mxu0 %v481
    %949 = vmatpush.msra.mxu0 %v480
    %950 = vmatpush.msra.mxu0 %v479
    %951 = vmatpush.msra.mxu0 %v478
    %952 = vmatpush.msra.mxu0 %v477
    %953 = vmatpush.msra.mxu0 %v476
    %954 = vmatpush.msra.mxu0 %v475
    %955 = vmatpush.msra.mxu0 %v474
    %956 = vmatpush.msra.mxu0 %v473
    %957 = vmatpush.msra.mxu0 %v472
    %958 = vmatpush.msra.mxu0 %v471
    %959 = vmatpush.msra.mxu0 %v470
    %960 = vmatpush.msra.mxu0 %v469
    %961 = vmatmul.f32.gmra.mxu0 %v115
    %v962 = vpop.f32.mrf.mxu0
    %v963 = vadd.f32 %v943, %v962
    %964 = vdwg.mxu0
    %965 = vmatpush.msra.mxu0 %v500
    %966 = vmatpush.msra.mxu0 %v499
    %967 = vmatpush.msra.mxu0 %v498
    %968 = vmatpush.msra.mxu0 %v497
    %969 = vmatpush.msra.mxu0 %v496
    %970 = vmatpush.msra.mxu0 %v495
    %971 = vmatpush.msra.mxu0 %v494
    %972 = vmatpush.msra.mxu0 %v493
    %973 = vmatpush.msra.mxu0 %v492
    %974 = vmatpush.msra.mxu0 %v491
    %975 = vmatpush.msra.mxu0 %v490
    %976 = vmatpush.msra.mxu0 %v489
    %977 = vmatpush.msra.mxu0 %v488
    %978 = vmatpush.msra.mxu0 %v487
    %979 = vmatpush.msra.mxu0 %v486
    %980 = vmatpush.msra.mxu0 %v485
    %981 = vmatmul.f32.gmra.mxu0 %v116
    %v982 = vpop.f32.mrf.mxu0
    %v983 = vadd.f32 %v963, %v982
    %984 = vdwg.mxu0
    %v985 = vmax.f32 %v983, 0.0
    %v986 = vld [vmem:[#allocation8] sm:$0xff]
    %v987 = vld [vmem:[#allocation8 + $0x8] sm:$0xff]
    %v988 = vld [vmem:[#allocation8 + $0x10] sm:$0xff]
    %v989 = vld [vmem:[#allocation8 + $0x18] sm:$0xff]
    %v990 = vld [vmem:[#allocation8 + $0x20] sm:$0xff]
    %v991 = vld [vmem:[#allocation8 + $0x28] sm:$0xff]
    %v992 = vld [vmem:[#allocation8 + $0x30] sm:$0xff]
    %v993 = vld [vmem:[#allocation8 + $0x38] sm:$0xff]
    %v994 = vld [vmem:[#allocation8 + $0x40] sm:$0xff]
    %v995 = vld [vmem:[#allocation8 + $0x48] sm:$0xff]
    %v996 = vld [vmem:[#allocation8 + $0x50] sm:$0xff]
    %v997 = vld [vmem:[#allocation8 + $0x58] sm:$0xff]
    %v998 = vld [vmem:[#allocation8 + $0x60] sm:$0xff]
    %v999 = vld [vmem:[#allocation8 + $0x68] sm:$0xff]
    %v1000 = vld [vmem:[#allocation8 + $0x70] sm:$0xff]
    %v1001 = vld [vmem:[#allocation8 + $0x78] sm:$0xff]
    %v1002 = vld [vmem:[#allocation10] sm:$0x1]
    %v1004 = vperm.slane %v1002, 0
    %1006 = vmatpush.msra.mxu0 %v1001
    %1007 = vmatpush.msra.mxu0 %v1000
    %1008 = vmatpush.msra.mxu0 %v999
    %1009 = vmatpush.msra.mxu0 %v998
    %1010 = vmatpush.msra.mxu0 %v997
    %1011 = vmatpush.msra.mxu0 %v996
    %1012 = vmatpush.msra.mxu0 %v995
    %1013 = vmatpush.msra.mxu0 %v994
    %1014 = vmatpush.msra.mxu0 %v993
    %1015 = vmatpush.msra.mxu0 %v992
    %1016 = vmatpush.msra.mxu0 %v991
    %1017 = vmatpush.msra.mxu0 %v990
    %1018 = vmatpush.msra.mxu0 %v989
    %1019 = vmatpush.msra.mxu0 %v988
    %1020 = vmatpush.msra.mxu0 %v987
    %1021 = vmatpush.msra.mxu0 %v986
    %1022 = vmatmul.f32.gmra.mxu0 %v985
    %v1023 = vpop.f32.mrf.mxu0
    %v1024 = vadd.f32 %v1004, %v1023
    %1025 = vdwg.mxu0
    %1026 = vst [vmem:[#allocation11] sm:$0xff] %v1024
    // Predicated region
    $region42: #{tpu_custom_call.1} parent=1 // pred_check
      _
    $region43: #{tpu_custom_call.1} parent=1 // pred_check_branch
      %1028 = sbr.rel (0) target = $region45
    $region44: #{tpu_custom_call.1} parent=1 // pred_region
      %1030 = vsyncadd [#allocation4], 0
      %s1032 = sshll.u32 [#allocation11], 4
      %s1033 = int_to_ptr.vmem [resolvable:$true] %s1032
      %s1034 = sshll.u32 %s5, 4
      %s1035 = int_to_ptr.hbm [resolvable:$true] %s1034
      %1037 = dma.vmem_to_hbm [thread:$0]  %s1033, 128, %s1035, [#allocation4]
    $region45: #{tpu_custom_call.1} parent=1 // pred_fallthru
      _
    // Predicated region
    $region46: #{tpu_custom_call.1} parent=1 // pred_check
      _
    $region47: #{tpu_custom_call.1} parent=1 // pred_check_branch
      %1039 = sbr.rel (0) target = $region49
    $region48: #{tpu_custom_call.1} parent=1 // pred_region
      %1041 = dma.done [#allocation4], 128
    $region49: #{tpu_custom_call.1} parent=1 // pred_fallthru
      _
    %1042 = vsyncpa [#allocation3], 1
    %1043 = vsyncpa [#allocation6], 1
    %1044 = vsyncpa [#allocation9], 1
    %1045 = vsyncpa [#allocation4], 1

</llo_original>
